<compile_context>
chip_gen: v7x
topology: tpu7x:2x2x1
jax: 0.10.0
libtpu: 0.0.40
codegen_flags: <defaults>
</compile_context>

<pallas_src>
import numpy as np
import jax
import jax.numpy as jnp
from jax.experimental import pallas as pl
from jax.experimental.pallas import tpu as pltpu


# ------------------------------------------------------------------ fused kernel

def _make_block_kernel(H, W, Cin, Cout, have_skip, K=3):
    HW = H * W

    def shift_flat(a, d):
        # a: (C, HW) row-major flattened image, channels on sublanes, HW on lanes.
        # Returns s with s[:, i] = a[:, i + d] when 0 <= i + d < HW, else 0.
        if d == 0:
            return a
        C = a.shape[0]
        z = jnp.zeros((C, abs(d)), a.dtype)
        if d > 0:
            return jnp.concatenate([a[:, d:], z], axis=1)
        return jnp.concatenate([z, a[:, :HW + d]], axis=1)

    def tap_stack(a, not_left, not_right):
        # Stack the 9 shifted (zero-padded) copies of `a` along the contraction
        # axis -> (K*K*C, HW), (kh,kw)-major / channel-minor, matching the fused
        # weights.  Vertical out-of-image taps are already zero thanks to the
        # zero-filling shift; horizontal row-boundary wrap is killed by the
        # precomputed edge masks.
        pieces = []
        for kh in range(K):
            for kw in range(K):
                s = shift_flat(a, (kh - 1) * W + (kw - 1))
                if kw == 0:
                    s = s * not_left
                elif kw == 2:
                    s = s * not_right
                pieces.append(s)
        return jnp.concatenate(pieces, axis=0)

    def kernel(x_ref, edge_ref, w1_ref, b1_ref, w2_ref, b2_ref, *rest):
        if have_skip:
            ws_ref, bs_ref, o_ref = rest
        else:
            (o_ref,) = rest

        x = x_ref[0]                        # (Cin, HW) channel-major, HW on lanes
        not_left = edge_ref[0:1, :]         # (1, HW): 0.0 in column 0,   else 1.0
        not_right = edge_ref[1:2, :]        # (1, HW): 0.0 in column W-1, else 1.0

        # ---- conv1 (3x3, ich -> och) + ReLU : ONE (Cout,9Cin) x (9Cin,HW) matmul
        s1 = tap_stack(x, not_left, not_right)
        h1 = jnp.dot(w1_ref[...], s1, preferred_element_type=jnp.float32)
        h1 = jnp.maximum(h1 + b1_ref[...], 0.0)                   # (Cout, HW)

        # ---- conv2 (3x3, och -> och) : ONE (Cout,9Cout) x (9Cout,HW) matmul
        s2 = tap_stack(h1, not_left, not_right)
        x1 = jnp.dot(w2_ref[...], s2,
                     preferred_element_type=jnp.float32) + b2_ref[...]

        # ---- skip path: 1x1 conv if ich != och, otherwise the input itself
        if have_skip:
            x2 = jnp.dot(ws_ref[...], x,
                         preferred_element_type=jnp.float32) + bs_ref[...]
        else:
            x2 = x

        # (Cout, HW): HW on lanes -> dense, unmasked stores
        o_ref[0] = jnp.maximum(x1 + x2, 0.0).astype(o_ref.dtype)

    return kernel


def _edge_masks(H, W):
    # (2, H*W) f32: row 0 = "not in column 0", row 1 = "not in column W-1".
    col = jnp.arange(H * W, dtype=jnp.int32) % W
    return jnp.stack([(col != 0), (col != W - 1)]).astype(jnp.float32)


@jax.jit
def block_forward(x_nchw, params):
    """Public entry point: NCHW in / NCHW out, like the PyTorch module."""
    w1f, b1, w2f, b2, ws, bs = params
    N, Cin, H, W = x_nchw.shape
    HW = H * W
    Cout = w1f.shape[0]
    have_skip = ws is not None
    K2 = w1f.shape[1] // Cin                         # = 9

    kernel = _make_block_kernel(H, W, Cin, Cout, have_skip)

    x_flat = x_nchw.reshape(N, Cin, HW)              # free reshape (stays NC(HW))
    edge = _edge_masks(H, W)                         # constant-folded under jit

    inputs = [x_flat, edge, w1f, b1, w2f, b2]
    in_specs = [
        pl.BlockSpec((1, Cin, HW), lambda n: (n, 0, 0)),
        pl.BlockSpec((2, HW), lambda n: (0, 0)),
        pl.BlockSpec((Cout, K2 * Cin), lambda n: (0, 0)),
        pl.BlockSpec((Cout, 1), lambda n: (0, 0)),
        pl.BlockSpec((Cout, K2 * Cout), lambda n: (0, 0)),
        pl.BlockSpec((Cout, 1), lambda n: (0, 0)),
    ]
    if have_skip:
        inputs += [ws, bs]
        in_specs += [pl.BlockSpec((Cout, Cin), lambda n: (0, 0)),
                     pl.BlockSpec((Cout, 1), lambda n: (0, 0))]

    flops = 2 * N * HW * Cout * (K2 * Cin + K2 * Cout
                                 + (Cin if have_skip else 0))
    bytes_accessed = 4 * (N * Cin * HW + N * Cout * HW + 2 * HW
                          + Cout * K2 * Cin + Cout * K2 * Cout + 2 * Cout
                          + ((Cout * Cin + Cout) if have_skip else 0))

    y = pl.pallas_call(
        kernel,
        out_shape=jax.ShapeDtypeStruct((N, Cout, HW), x_nchw.dtype),
        grid=(N,),
        in_specs=in_specs,
        out_specs=pl.BlockSpec((1, Cout, HW), lambda n: (n, 0, 0)),
        compiler_params=pltpu.CompilerParams(
            dimension_semantics=("parallel",)),      # batch across TCs on v7x
        cost_estimate=pl.CostEstimate(flops=flops, transcendentals=0,
                                      bytes_accessed=bytes_accessed),
    )(*inputs)

    return y.reshape(N, Cout, H, W)                  # free reshape back to NCHW


# ------------------------------------------------------------ parameter handling

def _fuse_conv_weight(w_pt):
    # PyTorch Conv2d weight (Cout, Cin, K, K) -> fused (Cout, K*K*Cin),
    # (kh, kw)-major / channel-minor, matching tap_stack's row ordering.
    Cout, Cin, K, _ = w_pt.shape
    return jnp.transpose(jnp.asarray(w_pt), (0, 2, 3, 1)).reshape(Cout, K * K * Cin)


def make_params(torch_style, ich, och):
    """torch_style: ((w1,b1), (w2,b2), skip) with PyTorch-layout weights."""
    (w1, b1), (w2, b2), skip = torch_style
    w1f = _fuse_conv_weight(w1)
    w2f = _fuse_conv_weight(w2)
    if skip is None:                                  # ich == och -> identity skip
        ws, bs = None, None
    else:
        wsk, bsk = skip                               # (och, ich, 1, 1), (och,)
        ws = jnp.asarray(wsk)[:, :, 0, 0]             # (Cout, Cin)
        bs = jnp.asarray(bsk).reshape(-1, 1)          # (Cout, 1)
    return (w1f, jnp.asarray(b1).reshape(-1, 1),
            w2f, jnp.asarray(b2).reshape(-1, 1), ws, bs)


def init_torch_style(key, ich, och):
    """Mimic PyTorch default Conv2d init (uniform +-1/sqrt(fan_in))."""
    def u(k, shape, fan_in):
        bound = 1.0 / np.sqrt(fan_in)
        return jax.random.uniform(k, shape, jnp.float32, -bound, bound)

    ks = jax.random.split(key, 6)
    w1 = u(ks[0], (och, ich, 3, 3), ich * 9)
    b1 = u(ks[1], (och,), ich * 9)
    w2 = u(ks[2], (och, och, 3, 3), och * 9)
    b2 = u(ks[3], (och,), och * 9)
    if ich != och:
        skip = (u(ks[4], (och, ich, 1, 1), ich), u(ks[5], (och,), ich))
    else:
        skip = None
    return (w1, b1), (w2, b2), skip


# --------------------------------------------------------------- pure-JAX reference

def _ref_forward(x_nchw, torch_style):
    (w1, b1), (w2, b2), skip = torch_style
    x = jnp.transpose(x_nchw, (0, 2, 3, 1))

    def conv(h, w, b, pad):
        o = jax.lax.conv_general_dilated(
            h, jnp.transpose(w, (2, 3, 1, 0)), (1, 1),
            ((pad, pad), (pad, pad)),
            dimension_numbers=("NHWC", "HWIO", "NHWC"))
        return o + b

    h = jnp.maximum(conv(x, w1, b1, 1), 0.0)
    x1 = conv(h, w2, b2, 1)
    x2 = x if skip is None else conv(x, skip[0], skip[1], 0)
    out = jnp.maximum(x1 + x2, 0.0)
    return jnp.transpose(out, (0, 3, 1, 2))


# ------------------------------------------------------------------------- main

if __name__ == "__main__":
    key = jax.random.PRNGKey(0)
    kp1, kp2, kx1, kx2 = jax.random.split(key, 4)

    # Case 1: ich != och -> 1x1-conv skip path exercised
    ich, och = 4, 16
    ts1 = init_torch_style(kp1, ich, och)
    p1 = make_params(ts1, ich, och)
    x1 = jax.random.normal(kx1, (2, ich, 16, 16), jnp.float32)   # NCHW like PyTorch

    out1 = jax.block_until_ready(block_forward(x1, p1))
    assert out1.shape == (2, och, 16, 16), out1.shape
    np.testing.assert_allclose(np.asarray(out1),
                               np.asarray(_ref_forward(x1, ts1)),
                               atol=1e-3, rtol=1e-3)

    # Case 2: ich == och -> identity skip (no skip matmul / skip weights at all)
    ts2 = init_torch_style(kp2, och, och)
    p2 = make_params(ts2, och, och)
    x2 = jax.random.normal(kx2, (2, och, 16, 16), jnp.float32)

    out2 = jax.block_until_ready(block_forward(x2, p2))
    assert out2.shape == (2, och, 16, 16), out2.shape
    np.testing.assert_allclose(np.asarray(out2),
                               np.asarray(_ref_forward(x2, ts2)),
                               atol=1e-3, rtol=1e-3)

    print("KERNEL_OK")
</pallas_src>

<mosaic_0001>
module attributes {stable_mosaic.version = 11 : i64} {
  func.func @kernel(%arg0: i32, %arg1: memref<1x4x256xf32, #tpu.memory_space<vmem>>, %arg2: memref<2x256xf32, #tpu.memory_space<vmem>>, %arg3: memref<16x36xf32, #tpu.memory_space<vmem>>, %arg4: memref<16x1xf32, #tpu.memory_space<vmem>>, %arg5: memref<16x144xf32, #tpu.memory_space<vmem>>, %arg6: memref<16x1xf32, #tpu.memory_space<vmem>>, %arg7: memref<16x4xf32, #tpu.memory_space<vmem>>, %arg8: memref<16x1xf32, #tpu.memory_space<vmem>>, %arg9: memref<1x16x256xf32, #tpu.memory_space<vmem>>) attributes {dimension_semantics = [#tpu.dimension_semantics<parallel>], iteration_bounds = array<i64: 2>, scalar_prefetch = 0 : i64, scratch_operands = 0 : i64, tpu.core_type = #tpu.core_type<tc>, window_params = [{transform_indices = @transform_0, window_bounds = array<i64: 1, 4, 256>}, {pipeline_mode = #tpu.pipeline_mode<synchronous>, transform_indices = @transform_1, window_bounds = array<i64: 2, 256>}, {pipeline_mode = #tpu.pipeline_mode<synchronous>, transform_indices = @transform_2, window_bounds = array<i64: 16, 36>}, {pipeline_mode = #tpu.pipeline_mode<synchronous>, transform_indices = @transform_3, window_bounds = array<i64: 16, 1>}, {pipeline_mode = #tpu.pipeline_mode<synchronous>, transform_indices = @transform_4, window_bounds = array<i64: 16, 144>}, {pipeline_mode = #tpu.pipeline_mode<synchronous>, transform_indices = @transform_5, window_bounds = array<i64: 16, 1>}, {pipeline_mode = #tpu.pipeline_mode<synchronous>, transform_indices = @transform_6, window_bounds = array<i64: 16, 4>}, {pipeline_mode = #tpu.pipeline_mode<synchronous>, transform_indices = @transform_7, window_bounds = array<i64: 16, 1>}, {transform_indices = @transform_8, window_bounds = array<i64: 1, 16, 256>}]} {
    %c0 = arith.constant 0 : index
    %c0_0 = arith.constant 0 : index
    %c0_1 = arith.constant 0 : index
    %0 = vector.load %arg1[%c0, %c0_0, %c0_1] : memref<1x4x256xf32, #tpu.memory_space<vmem>>, vector<1x4x256xf32>
    %1 = vector.shape_cast %0 : vector<1x4x256xf32> to vector<4x256xf32>
    %c0_2 = arith.constant 0 : index
    %c0_3 = arith.constant 0 : index
    %2 = vector.load %arg2[%c0_2, %c0_3] : memref<2x256xf32, #tpu.memory_space<vmem>>, vector<1x256xf32>
    %c1 = arith.constant 1 : index
    %c0_4 = arith.constant 0 : index
    %3 = vector.load %arg2[%c1, %c0_4] : memref<2x256xf32, #tpu.memory_space<vmem>>, vector<1x256xf32>
    %cst = arith.constant 0.000000e+00 : f32
    %4 = vector.broadcast %cst : f32 to vector<4x17xf32>
    %5 = vector.extract_strided_slice %1 {offsets = [0, 0], sizes = [4, 239], strides = [1, 1]} : vector<4x256xf32> to vector<4x239xf32>
    %6 = tpu.concatenate %4, %5 in 1 : vector<4x17xf32>, vector<4x239xf32> -> vector<4x256xf32>
    %7 = vector.broadcast %2 : vector<1x256xf32> to vector<4x256xf32>
    %8 = arith.mulf %6, %7 : vector<4x256xf32>
    %cst_5 = arith.constant 0.000000e+00 : f32
    %9 = vector.broadcast %cst_5 : f32 to vector<4x16xf32>
    %10 = vector.extract_strided_slice %1 {offsets = [0, 0], sizes = [4, 240], strides = [1, 1]} : vector<4x256xf32> to vector<4x240xf32>
    %11 = tpu.concatenate %9, %10 in 1 : vector<4x16xf32>, vector<4x240xf32> -> vector<4x256xf32>
    %cst_6 = arith.constant 0.000000e+00 : f32
    %12 = vector.broadcast %cst_6 : f32 to vector<4x15xf32>
    %13 = vector.extract_strided_slice %1 {offsets = [0, 0], sizes = [4, 241], strides = [1, 1]} : vector<4x256xf32> to vector<4x241xf32>
    %14 = tpu.concatenate %12, %13 in 1 : vector<4x15xf32>, vector<4x241xf32> -> vector<4x256xf32>
    %15 = vector.broadcast %3 : vector<1x256xf32> to vector<4x256xf32>
    %16 = arith.mulf %14, %15 : vector<4x256xf32>
    %cst_7 = arith.constant 0.000000e+00 : f32
    %17 = vector.broadcast %cst_7 : f32 to vector<4x1xf32>
    %18 = vector.extract_strided_slice %1 {offsets = [0, 0], sizes = [4, 255], strides = [1, 1]} : vector<4x256xf32> to vector<4x255xf32>
    %19 = tpu.concatenate %17, %18 in 1 : vector<4x1xf32>, vector<4x255xf32> -> vector<4x256xf32>
    %20 = vector.broadcast %2 : vector<1x256xf32> to vector<4x256xf32>
    %21 = arith.mulf %19, %20 : vector<4x256xf32>
    %cst_8 = arith.constant 0.000000e+00 : f32
    %22 = vector.broadcast %cst_8 : f32 to vector<4x1xf32>
    %23 = vector.extract_strided_slice %1 {offsets = [0, 1], sizes = [4, 255], strides = [1, 1]} : vector<4x256xf32> to vector<4x255xf32>
    %24 = tpu.concatenate %23, %22 in 1 : vector<4x255xf32>, vector<4x1xf32> -> vector<4x256xf32>
    %25 = vector.broadcast %3 : vector<1x256xf32> to vector<4x256xf32>
    %26 = arith.mulf %24, %25 : vector<4x256xf32>
    %cst_9 = arith.constant 0.000000e+00 : f32
    %27 = vector.broadcast %cst_9 : f32 to vector<4x15xf32>
    %28 = vector.extract_strided_slice %1 {offsets = [0, 15], sizes = [4, 241], strides = [1, 1]} : vector<4x256xf32> to vector<4x241xf32>
    %29 = tpu.concatenate %28, %27 in 1 : vector<4x241xf32>, vector<4x15xf32> -> vector<4x256xf32>
    %30 = vector.broadcast %2 : vector<1x256xf32> to vector<4x256xf32>
    %31 = arith.mulf %29, %30 : vector<4x256xf32>
    %cst_10 = arith.constant 0.000000e+00 : f32
    %32 = vector.broadcast %cst_10 : f32 to vector<4x16xf32>
    %33 = vector.extract_strided_slice %1 {offsets = [0, 16], sizes = [4, 240], strides = [1, 1]} : vector<4x256xf32> to vector<4x240xf32>
    %34 = tpu.concatenate %33, %32 in 1 : vector<4x240xf32>, vector<4x16xf32> -> vector<4x256xf32>
    %cst_11 = arith.constant 0.000000e+00 : f32
    %35 = vector.broadcast %cst_11 : f32 to vector<4x17xf32>
    %36 = vector.extract_strided_slice %1 {offsets = [0, 17], sizes = [4, 239], strides = [1, 1]} : vector<4x256xf32> to vector<4x239xf32>
    %37 = tpu.concatenate %36, %35 in 1 : vector<4x239xf32>, vector<4x17xf32> -> vector<4x256xf32>
    %38 = vector.broadcast %3 : vector<1x256xf32> to vector<4x256xf32>
    %39 = arith.mulf %37, %38 : vector<4x256xf32>
    %40 = tpu.concatenate %8, %11, %16, %21, %1, %26, %31, %34, %39 in 0 : vector<4x256xf32>, vector<4x256xf32>, vector<4x256xf32>, vector<4x256xf32>, vector<4x256xf32>, vector<4x256xf32>, vector<4x256xf32>, vector<4x256xf32>, vector<4x256xf32> -> vector<36x256xf32>
    %c0_12 = arith.constant 0 : index
    %c0_13 = arith.constant 0 : index
    %41 = vector.load %arg3[%c0_12, %c0_13] : memref<16x36xf32, #tpu.memory_space<vmem>>, vector<16x36xf32>
    %cst_14 = arith.constant dense<0.000000e+00> : vector<16x256xf32>
    %42 = tpu.matmul %41, %40, %cst_14 {dimension_numbers = #tpu.dot_dimension_numbers<[1], [0], [0], [1], [0, 0, 1, 1], [], []>} : vector<16x36xf32>, vector<36x256xf32>, vector<16x256xf32> -> vector<16x256xf32>
    %c0_15 = arith.constant 0 : index
    %c0_16 = arith.constant 0 : index
    %43 = vector.load %arg4[%c0_15, %c0_16] : memref<16x1xf32, #tpu.memory_space<vmem>>, vector<16x1xf32>
    %44 = vector.broadcast %43 : vector<16x1xf32> to vector<16x256xf32>
    %45 = arith.addf %42, %44 : vector<16x256xf32>
    %cst_17 = arith.constant 0.000000e+00 : f32
    %46 = vector.broadcast %cst_17 : f32 to vector<16x256xf32>
    %47 = arith.maximumf %45, %46 : vector<16x256xf32>
    %cst_18 = arith.constant 0.000000e+00 : f32
    %48 = vector.broadcast %cst_18 : f32 to vector<16x17xf32>
    %49 = vector.extract_strided_slice %47 {offsets = [0, 0], sizes = [16, 239], strides = [1, 1]} : vector<16x256xf32> to vector<16x239xf32>
    %50 = tpu.concatenate %48, %49 in 1 : vector<16x17xf32>, vector<16x239xf32> -> vector<16x256xf32>
    %51 = vector.broadcast %2 : vector<1x256xf32> to vector<16x256xf32>
    %52 = arith.mulf %50, %51 : vector<16x256xf32>
    %cst_19 = arith.constant 0.000000e+00 : f32
    %53 = vector.broadcast %cst_19 : f32 to vector<16x16xf32>
    %54 = vector.extract_strided_slice %47 {offsets = [0, 0], sizes = [16, 240], strides = [1, 1]} : vector<16x256xf32> to vector<16x240xf32>
    %55 = tpu.concatenate %53, %54 in 1 : vector<16x16xf32>, vector<16x240xf32> -> vector<16x256xf32>
    %cst_20 = arith.constant 0.000000e+00 : f32
    %56 = vector.broadcast %cst_20 : f32 to vector<16x15xf32>
    %57 = vector.extract_strided_slice %47 {offsets = [0, 0], sizes = [16, 241], strides = [1, 1]} : vector<16x256xf32> to vector<16x241xf32>
    %58 = tpu.concatenate %56, %57 in 1 : vector<16x15xf32>, vector<16x241xf32> -> vector<16x256xf32>
    %59 = vector.broadcast %3 : vector<1x256xf32> to vector<16x256xf32>
    %60 = arith.mulf %58, %59 : vector<16x256xf32>
    %cst_21 = arith.constant 0.000000e+00 : f32
    %61 = vector.broadcast %cst_21 : f32 to vector<16x1xf32>
    %62 = vector.extract_strided_slice %47 {offsets = [0, 0], sizes = [16, 255], strides = [1, 1]} : vector<16x256xf32> to vector<16x255xf32>
    %63 = tpu.concatenate %61, %62 in 1 : vector<16x1xf32>, vector<16x255xf32> -> vector<16x256xf32>
    %64 = vector.broadcast %2 : vector<1x256xf32> to vector<16x256xf32>
    %65 = arith.mulf %63, %64 : vector<16x256xf32>
    %cst_22 = arith.constant 0.000000e+00 : f32
    %66 = vector.broadcast %cst_22 : f32 to vector<16x1xf32>
    %67 = vector.extract_strided_slice %47 {offsets = [0, 1], sizes = [16, 255], strides = [1, 1]} : vector<16x256xf32> to vector<16x255xf32>
    %68 = tpu.concatenate %67, %66 in 1 : vector<16x255xf32>, vector<16x1xf32> -> vector<16x256xf32>
    %69 = vector.broadcast %3 : vector<1x256xf32> to vector<16x256xf32>
    %70 = arith.mulf %68, %69 : vector<16x256xf32>
    %cst_23 = arith.constant 0.000000e+00 : f32
    %71 = vector.broadcast %cst_23 : f32 to vector<16x15xf32>
    %72 = vector.extract_strided_slice %47 {offsets = [0, 15], sizes = [16, 241], strides = [1, 1]} : vector<16x256xf32> to vector<16x241xf32>
    %73 = tpu.concatenate %72, %71 in 1 : vector<16x241xf32>, vector<16x15xf32> -> vector<16x256xf32>
    %74 = vector.broadcast %2 : vector<1x256xf32> to vector<16x256xf32>
    %75 = arith.mulf %73, %74 : vector<16x256xf32>
    %cst_24 = arith.constant 0.000000e+00 : f32
    %76 = vector.broadcast %cst_24 : f32 to vector<16x16xf32>
    %77 = vector.extract_strided_slice %47 {offsets = [0, 16], sizes = [16, 240], strides = [1, 1]} : vector<16x256xf32> to vector<16x240xf32>
    %78 = tpu.concatenate %77, %76 in 1 : vector<16x240xf32>, vector<16x16xf32> -> vector<16x256xf32>
    %cst_25 = arith.constant 0.000000e+00 : f32
    %79 = vector.broadcast %cst_25 : f32 to vector<16x17xf32>
    %80 = vector.extract_strided_slice %47 {offsets = [0, 17], sizes = [16, 239], strides = [1, 1]} : vector<16x256xf32> to vector<16x239xf32>
    %81 = tpu.concatenate %80, %79 in 1 : vector<16x239xf32>, vector<16x17xf32> -> vector<16x256xf32>
    %82 = vector.broadcast %3 : vector<1x256xf32> to vector<16x256xf32>
    %83 = arith.mulf %81, %82 : vector<16x256xf32>
    %84 = tpu.concatenate %52, %55, %60, %65, %47, %70, %75, %78, %83 in 0 : vector<16x256xf32>, vector<16x256xf32>, vector<16x256xf32>, vector<16x256xf32>, vector<16x256xf32>, vector<16x256xf32>, vector<16x256xf32>, vector<16x256xf32>, vector<16x256xf32> -> vector<144x256xf32>
    %c0_26 = arith.constant 0 : index
    %c0_27 = arith.constant 0 : index
    %85 = vector.load %arg5[%c0_26, %c0_27] : memref<16x144xf32, #tpu.memory_space<vmem>>, vector<16x144xf32>
    %cst_28 = arith.constant dense<0.000000e+00> : vector<16x256xf32>
    %86 = tpu.matmul %85, %84, %cst_28 {dimension_numbers = #tpu.dot_dimension_numbers<[1], [0], [0], [1], [0, 0, 1, 1], [], []>} : vector<16x144xf32>, vector<144x256xf32>, vector<16x256xf32> -> vector<16x256xf32>
    %c0_29 = arith.constant 0 : index
    %c0_30 = arith.constant 0 : index
    %87 = vector.load %arg6[%c0_29, %c0_30] : memref<16x1xf32, #tpu.memory_space<vmem>>, vector<16x1xf32>
    %88 = vector.broadcast %87 : vector<16x1xf32> to vector<16x256xf32>
    %89 = arith.addf %86, %88 : vector<16x256xf32>
    %c0_31 = arith.constant 0 : index
    %c0_32 = arith.constant 0 : index
    %90 = vector.load %arg7[%c0_31, %c0_32] : memref<16x4xf32, #tpu.memory_space<vmem>>, vector<16x4xf32>
    %cst_33 = arith.constant dense<0.000000e+00> : vector<16x256xf32>
    %91 = tpu.matmul %90, %1, %cst_33 {dimension_numbers = #tpu.dot_dimension_numbers<[1], [0], [0], [1], [0, 0, 1, 1], [], []>} : vector<16x4xf32>, vector<4x256xf32>, vector<16x256xf32> -> vector<16x256xf32>
    %c0_34 = arith.constant 0 : index
    %c0_35 = arith.constant 0 : index
    %92 = vector.load %arg8[%c0_34, %c0_35] : memref<16x1xf32, #tpu.memory_space<vmem>>, vector<16x1xf32>
    %93 = vector.broadcast %92 : vector<16x1xf32> to vector<16x256xf32>
    %94 = arith.addf %91, %93 : vector<16x256xf32>
    %95 = arith.addf %89, %94 : vector<16x256xf32>
    %cst_36 = arith.constant 0.000000e+00 : f32
    %96 = vector.broadcast %cst_36 : f32 to vector<16x256xf32>
    %97 = arith.maximumf %95, %96 : vector<16x256xf32>
    %c0_37 = arith.constant 0 : index
    %c0_38 = arith.constant 0 : index
    %c0_39 = arith.constant 0 : index
    %98 = vector.load %arg9[%c0_37, %c0_38, %c0_39] : memref<1x16x256xf32, #tpu.memory_space<vmem>>, vector<1x16x256xf32>
    %99 = vector.shape_cast %98 : vector<1x16x256xf32> to vector<16x256xf32>
    %100 = vector.shape_cast %97 : vector<16x256xf32> to vector<1x16x256xf32>
    tpu.vector_store %arg9[%c0_37, %c0_38, %c0_39], %100 {strides = array<i32>} : memref<1x16x256xf32, #tpu.memory_space<vmem>>, vector<1x16x256xf32>,
    return
  }
  func.func @transform_0(%arg0: i32) -> (i32, i32, i32) {
    %c0_i32 = arith.constant 0 : i32
    %c0_i32_0 = arith.constant 0 : i32
    %c0_i32_1 = arith.constant 0 : i32
    return %arg0, %c0_i32, %c0_i32_0 : i32, i32, i32
  }
  func.func @transform_1(%arg0: i32) -> (i32, i32) {
    %c0_i32 = arith.constant 0 : i32
    %c0_i32_0 = arith.constant 0 : i32
    %c0_i32_1 = arith.constant 0 : i32
    return %c0_i32, %c0_i32_0 : i32, i32
  }
  func.func @transform_2(%arg0: i32) -> (i32, i32) {
    %c0_i32 = arith.constant 0 : i32
    %c0_i32_0 = arith.constant 0 : i32
    %c0_i32_1 = arith.constant 0 : i32
    return %c0_i32, %c0_i32_0 : i32, i32
  }
  func.func @transform_3(%arg0: i32) -> (i32, i32) {
    %c0_i32 = arith.constant 0 : i32
    %c0_i32_0 = arith.constant 0 : i32
    %c0_i32_1 = arith.constant 0 : i32
    return %c0_i32, %c0_i32_0 : i32, i32
  }
  func.func @transform_4(%arg0: i32) -> (i32, i32) {
    %c0_i32 = arith.constant 0 : i32
    %c0_i32_0 = arith.constant 0 : i32
    %c0_i32_1 = arith.constant 0 : i32
    return %c0_i32, %c0_i32_0 : i32, i32
  }
  func.func @transform_5(%arg0: i32) -> (i32, i32) {
    %c0_i32 = arith.constant 0 : i32
    %c0_i32_0 = arith.constant 0 : i32
    %c0_i32_1 = arith.constant 0 : i32
    return %c0_i32, %c0_i32_0 : i32, i32
  }
  func.func @transform_6(%arg0: i32) -> (i32, i32) {
    %c0_i32 = arith.constant 0 : i32
    %c0_i32_0 = arith.constant 0 : i32
    %c0_i32_1 = arith.constant 0 : i32
    return %c0_i32, %c0_i32_0 : i32, i32
  }
  func.func @transform_7(%arg0: i32) -> (i32, i32) {
    %c0_i32 = arith.constant 0 : i32
    %c0_i32_0 = arith.constant 0 : i32
    %c0_i32_1 = arith.constant 0 : i32
    return %c0_i32, %c0_i32_0 : i32, i32
  }
  func.func @transform_8(%arg0: i32) -> (i32, i32, i32) {
    %c0_i32 = arith.constant 0 : i32
    %c0_i32_0 = arith.constant 0 : i32
    %c0_i32_1 = arith.constant 0 : i32
    return %arg0, %c0_i32, %c0_i32_0 : i32, i32, i32
  }
}

</mosaic_0001>

<llo_original>
// kernel: block_forward.1
$region0: #{block_forward.1}
  #allocation0 [shape = 'u32[]', space=smem, size = 0x4, offset = 0x4, fixed_abs, tag = 'smem constant byte address 0x4 - core index']
  #allocation1 [shape = 'u32[144,128]{1,0:T(1,128)}', space=vmem, size = 0x12000, scoped, tag = 'internal scratch']
  %s0 = inlined_call_operand.vmem [shape: f32[2,4,256], index: 0, kind: input, shape index: {}]
  %s1 = inlined_call_operand.vmem [shape: f32[2,256], index: 1, kind: input, shape index: {}]
  %s2 = inlined_call_operand.vmem [shape: f32[16,36], index: 2, kind: input, shape index: {}]
  %s3 = inlined_call_operand.vmem [shape: f32[16,1], index: 3, kind: input, shape index: {}]
  %s4 = inlined_call_operand.vmem [shape: f32[16,144], index: 4, kind: input, shape index: {}]
  %s5 = inlined_call_operand.vmem [shape: f32[16,1], index: 5, kind: input, shape index: {}]
  %s6 = inlined_call_operand.vmem [shape: f32[16,4], index: 6, kind: input, shape index: {}]
  %s7 = inlined_call_operand.vmem [shape: f32[16,1], index: 7, kind: input, shape index: {}]
  %s8 = inlined_call_operand.vmem [shape: f32[2,16,256], index: 8, kind: output, shape index: {}]
  %s9 = sld [smem:[#allocation0]]
  $region65: #{block_forward.1} parent=0
    _
  %s11 = ssub.s32 1, %s9
  %s12 = scalar_select 0, %s11, %s9
  loop: start=0, step=1, limit=4
  $region2: #{block_forward.1} parent=0 // loop_pre_header
    _
  $region3: #{block_forward.1} parent=0 // loop_header
    %s14 = sphi 0, %s18
    %p15 = scmp.ge.s32.totalorder %s14, 4
    %s24 = sphi 0, %s26
    %s27 = sphi 0, %s24
    %s28 = sphi 0, %s27
    %s44 = sphi 0, %s28
    %s48 = sphi 0, %s48
    %s50 = sphi 0, %s48
    %s51 = sphi 0, %s50
    %s65 = sphi 0, %s51
    %s69 = sphi 0, %s69
    %s71 = sphi 0, %s69
    %s72 = sphi 0, %s71
    %s86 = sphi 0, %s72
    %s90 = sphi 0, %s90
    %s92 = sphi 0, %s90
    %s93 = sphi 0, %s92
    %s107 = sphi 0, %s93
    %s111 = sphi 0, %s111
    %s113 = sphi 0, %s111
    %s114 = sphi 0, %s113
    %s128 = sphi 0, %s114
    %s132 = sphi 0, %s132
    %s134 = sphi 0, %s132
    %s135 = sphi 0, %s134
    %s149 = sphi 0, %s135
    %s153 = sphi 0, %s153
    %s155 = sphi 0, %s153
    %s156 = sphi 0, %s155
    %s170 = sphi 0, %s156
    %s174 = sphi 0, %s174
    %s176 = sphi 0, %s174
    %s177 = sphi 0, %s176
    %s191 = sphi 0, %s177
    %s197 = sphi 0, %s199
    %s200 = sphi 0, %s197
    %s201 = sphi 0, %s200
    %s217 = sphi 0, %s201
  $region4: #{block_forward.1} parent=0 // loop_header_branch
    %17 = sbr.rel (%p15) target = $region8
  $region5: #{block_forward.1} parent=0 // loop_body
    %s19 = ssub.s32 %s14, 1
    %s20 = ssub.s32 %s14, 2
    %s21 = sadd.s32 %s14, 1
    %s22 = ssub.s32 %s14, %s21
    %p23 = scmp.eq.s32.totalorder %s22, 0
    %s25 = sadd.s32 %s24, 1
    %s26 = scalar_select %p23, %s24, %s25
    %p29 = pneg %p23
    %p30 = scmp.eq.s32.totalorder %s14, 1
    %p31 = por %p29, %p30
    %p32 = scmp.ne.s32.totalorder %s24, %s27
    %p33 = scmp.eq.s32.totalorder %s14, 0
    %p34 = por %p32, %p33
    %p35 = scmp.ne.s32.totalorder %s24, %s27
    %p36 = scmp.eq.s32.totalorder %s19, 1
    %p37 = por %p35, %p36
    %p38 = scmp.ne.s32.totalorder %s27, %s28
    %p39 = scmp.eq.s32.totalorder %s19, 0
    %p40 = por %p38, %p39
    %p41 = scmp.ne.s32.totalorder %s27, %s28
    %p42 = scmp.eq.s32.totalorder %s20, 1
    %p43 = por %p41, %p42
    %p45 = scmp.ne.s32.totalorder %s28, %s44
    %p46 = scmp.eq.s32.totalorder %s20, 0
    %p47 = por %p45, %p46
    %s49 = sadd.s32 %s48, 1
    %p52 = scmp.eq.s32.totalorder %s14, 1
    %p53 = scmp.ne.s32.totalorder %s48, %s50
    %p54 = scmp.eq.s32.totalorder %s14, 0
    %p55 = por %p53, %p54
    %p56 = scmp.ne.s32.totalorder %s48, %s50
    %p57 = scmp.eq.s32.totalorder %s19, 1
    %p58 = por %p56, %p57
    %p59 = scmp.ne.s32.totalorder %s50, %s51
    %p60 = scmp.eq.s32.totalorder %s19, 0
    %p61 = por %p59, %p60
    %p62 = scmp.ne.s32.totalorder %s50, %s51
    %p63 = scmp.eq.s32.totalorder %s20, 1
    %p64 = por %p62, %p63
    %p66 = scmp.ne.s32.totalorder %s51, %s65
    %p67 = scmp.eq.s32.totalorder %s20, 0
    %p68 = por %p66, %p67
    %s70 = sadd.s32 %s69, 1
    %p73 = scmp.eq.s32.totalorder %s14, 1
    %p74 = scmp.ne.s32.totalorder %s69, %s71
    %p75 = scmp.eq.s32.totalorder %s14, 0
    %p76 = por %p74, %p75
    %p77 = scmp.ne.s32.totalorder %s69, %s71
    %p78 = scmp.eq.s32.totalorder %s19, 1
    %p79 = por %p77, %p78
    %p80 = scmp.ne.s32.totalorder %s71, %s72
    %p81 = scmp.eq.s32.totalorder %s19, 0
    %p82 = por %p80, %p81
    %p83 = scmp.ne.s32.totalorder %s71, %s72
    %p84 = scmp.eq.s32.totalorder %s20, 1
    %p85 = por %p83, %p84
    %p87 = scmp.ne.s32.totalorder %s72, %s86
    %p88 = scmp.eq.s32.totalorder %s20, 0
    %p89 = por %p87, %p88
    %s91 = sadd.s32 %s90, 1
    %p94 = scmp.eq.s32.totalorder %s14, 1
    %p95 = scmp.ne.s32.totalorder %s90, %s92
    %p96 = scmp.eq.s32.totalorder %s14, 0
    %p97 = por %p95, %p96
    %p98 = scmp.ne.s32.totalorder %s90, %s92
    %p99 = scmp.eq.s32.totalorder %s19, 1
    %p100 = por %p98, %p99
    %p101 = scmp.ne.s32.totalorder %s92, %s93
    %p102 = scmp.eq.s32.totalorder %s19, 0
    %p103 = por %p101, %p102
    %p104 = scmp.ne.s32.totalorder %s92, %s93
    %p105 = scmp.eq.s32.totalorder %s20, 1
    %p106 = por %p104, %p105
    %p108 = scmp.ne.s32.totalorder %s93, %s107
    %p109 = scmp.eq.s32.totalorder %s20, 0
    %p110 = por %p108, %p109
    %s112 = sadd.s32 %s111, 1
    %p115 = scmp.eq.s32.totalorder %s14, 1
    %p116 = scmp.ne.s32.totalorder %s111, %s113
    %p117 = scmp.eq.s32.totalorder %s14, 0
    %p118 = por %p116, %p117
    %p119 = scmp.ne.s32.totalorder %s111, %s113
    %p120 = scmp.eq.s32.totalorder %s19, 1
    %p121 = por %p119, %p120
    %p122 = scmp.ne.s32.totalorder %s113, %s114
    %p123 = scmp.eq.s32.totalorder %s19, 0
    %p124 = por %p122, %p123
    %p125 = scmp.ne.s32.totalorder %s113, %s114
    %p126 = scmp.eq.s32.totalorder %s20, 1
    %p127 = por %p125, %p126
    %p129 = scmp.ne.s32.totalorder %s114, %s128
    %p130 = scmp.eq.s32.totalorder %s20, 0
    %p131 = por %p129, %p130
    %s133 = sadd.s32 %s132, 1
    %p136 = scmp.eq.s32.totalorder %s14, 1
    %p137 = scmp.ne.s32.totalorder %s132, %s134
    %p138 = scmp.eq.s32.totalorder %s14, 0
    %p139 = por %p137, %p138
    %p140 = scmp.ne.s32.totalorder %s132, %s134
    %p141 = scmp.eq.s32.totalorder %s19, 1
    %p142 = por %p140, %p141
    %p143 = scmp.ne.s32.totalorder %s134, %s135
    %p144 = scmp.eq.s32.totalorder %s19, 0
    %p145 = por %p143, %p144
    %p146 = scmp.ne.s32.totalorder %s134, %s135
    %p147 = scmp.eq.s32.totalorder %s20, 1
    %p148 = por %p146, %p147
    %p150 = scmp.ne.s32.totalorder %s135, %s149
    %p151 = scmp.eq.s32.totalorder %s20, 0
    %p152 = por %p150, %p151
    %s154 = sadd.s32 %s153, 1
    %p157 = scmp.eq.s32.totalorder %s14, 1
    %p158 = scmp.ne.s32.totalorder %s153, %s155
    %p159 = scmp.eq.s32.totalorder %s14, 0
    %p160 = por %p158, %p159
    %p161 = scmp.ne.s32.totalorder %s153, %s155
    %p162 = scmp.eq.s32.totalorder %s19, 1
    %p163 = por %p161, %p162
    %p164 = scmp.ne.s32.totalorder %s155, %s156
    %p165 = scmp.eq.s32.totalorder %s19, 0
    %p166 = por %p164, %p165
    %p167 = scmp.ne.s32.totalorder %s155, %s156
    %p168 = scmp.eq.s32.totalorder %s20, 1
    %p169 = por %p167, %p168
    %p171 = scmp.ne.s32.totalorder %s156, %s170
    %p172 = scmp.eq.s32.totalorder %s20, 0
    %p173 = por %p171, %p172
    %s175 = sadd.s32 %s174, 1
    %p178 = scmp.eq.s32.totalorder %s14, 1
    %p179 = scmp.ne.s32.totalorder %s174, %s176
    %p180 = scmp.eq.s32.totalorder %s14, 0
    %p181 = por %p179, %p180
    %p182 = scmp.ne.s32.totalorder %s174, %s176
    %p183 = scmp.eq.s32.totalorder %s19, 1
    %p184 = por %p182, %p183
    %p185 = scmp.ne.s32.totalorder %s176, %s177
    %p186 = scmp.eq.s32.totalorder %s19, 0
    %p187 = por %p185, %p186
    %p188 = scmp.ne.s32.totalorder %s176, %s177
    %p189 = scmp.eq.s32.totalorder %s20, 1
    %p190 = por %p188, %p189
    %p192 = scmp.ne.s32.totalorder %s177, %s191
    %p193 = scmp.eq.s32.totalorder %s20, 0
    %p194 = por %p192, %p193
    %s195 = ssub.s32 %s14, %s21
    %p196 = scmp.eq.s32.totalorder %s195, 0
    %s198 = sadd.s32 %s197, 1
    %s199 = scalar_select %p196, %s197, %s198
    %p202 = pneg %p196
    %p203 = scmp.eq.s32.totalorder %s14, 1
    %p204 = por %p202, %p203
    %p205 = scmp.ne.s32.totalorder %s197, %s200
    %p206 = scmp.eq.s32.totalorder %s14, 0
    %p207 = por %p205, %p206
    %p208 = scmp.ne.s32.totalorder %s197, %s200
    %p209 = scmp.eq.s32.totalorder %s19, 1
    %p210 = por %p208, %p209
    %p211 = scmp.ne.s32.totalorder %s200, %s201
    %p212 = scmp.eq.s32.totalorder %s19, 0
    %p213 = por %p211, %p212
    %p214 = scmp.ne.s32.totalorder %s200, %s201
    %p215 = scmp.eq.s32.totalorder %s20, 1
    %p216 = por %p214, %p215
    %p218 = scmp.ne.s32.totalorder %s201, %s217
    %p219 = scmp.eq.s32.totalorder %s20, 0
    %p220 = por %p218, %p219
    %p221 = scmp.le.s32.totalorder 1, %s14
    %p222 = scmp.lt.s32.totalorder %s14, 3
    %p223 = pnand %p221, %p222
    %p224 = pneg %p223
    // Predicated region
    $region9: #{block_forward.1} parent=5 // pred_check
      _
    $region10: #{block_forward.1} parent=5 // pred_check_branch
      %226 = sbr.rel (%p223) target = $region12
    $region11: #{block_forward.1} parent=5 // pred_region
      %s227 = ssub.s32 %s14, 1
      // Predicated region
      $region13: #{block_forward.1} parent=11 // pred_check
        %p228 = pneg %p61
      $region14: #{block_forward.1} parent=11 // pred_check_branch
        %230 = sbr.rel (%p228) target = $region16
      $region15: #{block_forward.1} parent=11 // pred_region
        _
      $region16: #{block_forward.1} parent=11 // pred_fallthru
        _
      // Predicated region
      $region17: #{block_forward.1} parent=11 // pred_check
        %p231 = pneg %p82
      $region18: #{block_forward.1} parent=11 // pred_check_branch
        %233 = sbr.rel (%p231) target = $region20
      $region19: #{block_forward.1} parent=11 // pred_region
        _
      $region20: #{block_forward.1} parent=11 // pred_fallthru
        _
      // Predicated region
      $region21: #{block_forward.1} parent=11 // pred_check
        %p234 = pneg %p103
      $region22: #{block_forward.1} parent=11 // pred_check_branch
        %236 = sbr.rel (%p234) target = $region24
      $region23: #{block_forward.1} parent=11 // pred_region
        _
      $region24: #{block_forward.1} parent=11 // pred_fallthru
        _
      // Predicated region
      $region25: #{block_forward.1} parent=11 // pred_check
        %p237 = pneg %p124
      $region26: #{block_forward.1} parent=11 // pred_check_branch
        %239 = sbr.rel (%p237) target = $region28
      $region27: #{block_forward.1} parent=11 // pred_region
        _
      $region28: #{block_forward.1} parent=11 // pred_fallthru
        _
      // Predicated region
      $region29: #{block_forward.1} parent=11 // pred_check
        %p240 = pneg %p145
      $region30: #{block_forward.1} parent=11 // pred_check_branch
        %242 = sbr.rel (%p240) target = $region32
      $region31: #{block_forward.1} parent=11 // pred_region
        _
      $region32: #{block_forward.1} parent=11 // pred_fallthru
        _
      // Predicated region
      $region33: #{block_forward.1} parent=11 // pred_check
        %p243 = pneg %p166
      $region34: #{block_forward.1} parent=11 // pred_check_branch
        %245 = sbr.rel (%p243) target = $region36
      $region35: #{block_forward.1} parent=11 // pred_region
        _
      $region36: #{block_forward.1} parent=11 // pred_fallthru
        _
      // Predicated region
      $region37: #{block_forward.1} parent=11 // pred_check
        %p246 = pneg %p187
      $region38: #{block_forward.1} parent=11 // pred_check_branch
        %248 = sbr.rel (%p246) target = $region40
      $region39: #{block_forward.1} parent=11 // pred_region
        _
      $region40: #{block_forward.1} parent=11 // pred_fallthru
        _
    $region12: #{block_forward.1} parent=5 // pred_fallthru
      _
    %p249 = scmp.lt.s32.totalorder %s14, 2
    // Predicated region
    $region41: #{block_forward.1} parent=5 // pred_check
      %p250 = pneg %p249
    $region42: #{block_forward.1} parent=5 // pred_check_branch
      %252 = sbr.rel (%p250) target = $region44
    $region43: #{block_forward.1} parent=5 // pred_region
      // Predicated region
      $region45: #{block_forward.1} parent=43 // pred_check
        %p253 = pneg %p34
      $region46: #{block_forward.1} parent=43 // pred_check_branch
        %255 = sbr.rel (%p253) target = $region48
      $region47: #{block_forward.1} parent=43 // pred_region
        %p256 = scmp.lt.s32.totalorder %s14, 1
        %s257 = scalar_select %p256, %s14, 1
        %s258 = smul.addr %s257, 2
        %s259 = smul.addr %s258, 4
        %s260 = scalar_lea.vmem %s0, %s259
      $region48: #{block_forward.1} parent=43 // pred_fallthru
        _
    $region44: #{block_forward.1} parent=5 // pred_fallthru
      _
    %p261 = scmp.le.s32.totalorder 1, %s14
    %p262 = scmp.lt.s32.totalorder %s14, 3
    %p263 = pnand %p261, %p262
    %p264 = pneg %p263
    // Predicated region
    $region49: #{block_forward.1} parent=5 // pred_check
      _
    $region50: #{block_forward.1} parent=5 // pred_check_branch
      %266 = sbr.rel (%p263) target = $region52
    $region51: #{block_forward.1} parent=5 // pred_region
      %s267 = ssub.s32 %s14, 1
      %p268 = scmp.lt.s32.totalorder %s19, 1
      %s269 = scalar_select %p268, %s19, 1
      %s270 = smul.addr %s269, 2
      %s271 = smul.addr %s270, 4
      %s272 = scalar_lea.vmem %s0, %s271
      %p273 = pneg %p40
      %p274 = pneg %p37
      %p275 = pneg %p61
      %p276 = pneg %p58
      %p277 = pneg %p82
      %p278 = pneg %p79
      %p279 = pneg %p103
      %p280 = pneg %p100
      %p281 = pneg %p124
      %p282 = pneg %p121
      %p283 = pneg %p145
      %p284 = pneg %p142
      %p285 = pneg %p166
      %p286 = pneg %p163
      %p287 = pneg %p187
      %p288 = pneg %p184
      %p289 = pneg %p213
      %p290 = pneg %p210
      %p291 = scmp.lt.s32.totalorder %s19, 1
      %s292 = scalar_select %p291, %s19, 1
      %s293 = smul.addr %s292, 4
      %s294 = smul.addr %s293, 8
      %s295 = scalar_lea.vmem %s8, %s294
      %p296 = scmp.lt.s32.totalorder %s19, 1
      %s297 = scalar_select %p296, %s19, 1
      %s298 = smul.addr %s297, 2
      %s299 = smul.addr %s298, 4
      %s300 = scalar_lea.vmem %s0, %s299
      %p301 = scmp.lt.s32.totalorder %s19, 1
      %s302 = scalar_select %p301, %s19, 1
      %s303 = smul.addr %s302, 4
      %s304 = smul.addr %s303, 8
      %s305 = scalar_lea.vmem %s8, %s304
      %v306 = vld [vmem:[%s300] sm:$0xff]
      %v307 = vld [vmem:[%s1] ss:$2 sm:$0x3]
      %s308 = scalar_lea.vmem %s1, 1
      %v309 = vld [vmem:[%s308] ss:$2 sm:$0x3]
      %v311 = vcombine.high %v306, %v306
      %312 = vrot.lane.b32.xlu0 %v306, 17
      %v313 = vpop.permute.xlu0 %312
      %314 = vrot.lane.b32.xlu0 %v311, 17
      %v315 = vpop.permute.xlu0 %314
      %vm316 = vcmask 138240
      %v317 = vsel %vm316, %v313, %v315
      %v320 = vsel %vm316, 0.0, %v313
      %v322 = vlaneseq
      %v323 = vshrl.u32 %v322, 7
      %v324 = vsub.s32 0, %v323
      %v325 = vrot.slane %v307, %v324
      %v326 = vlaneseq
      %v327 = vshrl.u32 %v326, 7
      %v328 = vsub.s32 1, %v327
      %v329 = vrot.slane %v307, %v328
      %v332 = vmul.f32 %v320, %v325
      %v333 = vmul.f32 %v317, %v329
      %334 = vrot.lane.b32.xlu0 %v306, 16
      %v335 = vpop.permute.xlu0 %334
      %336 = vrot.lane.b32.xlu0 %v311, 16
      %v337 = vpop.permute.xlu0 %336
      %vm338 = vcmask 130048
      %v339 = vsel %vm338, %v335, %v337
      %v341 = vsel %vm338, 0.0, %v335
      %342 = vrot.lane.b32.xlu0 %v306, 15
      %v343 = vpop.permute.xlu0 %342
      %344 = vrot.lane.b32.xlu0 %v311, 15
      %v345 = vpop.permute.xlu0 %344
      %vm346 = vcmask 121856
      %v347 = vsel %vm346, %v343, %v345
      %v350 = vsel %vm346, 0.0, %v343
      %v352 = vlaneseq
      %v353 = vshrl.u32 %v352, 7
      %v354 = vsub.s32 0, %v353
      %v355 = vrot.slane %v309, %v354
      %v356 = vlaneseq
      %v357 = vshrl.u32 %v356, 7
      %v358 = vsub.s32 1, %v357
      %v359 = vrot.slane %v309, %v358
      %v362 = vmul.f32 %v350, %v355
      %v363 = vmul.f32 %v347, %v359
      %364 = vrot.lane.b32.xlu0 %v306, 1
      %v365 = vpop.permute.xlu0 %364
      %366 = vrot.lane.b32.xlu0 %v311, 1
      %v367 = vpop.permute.xlu0 %366
      %vm368 = vcmask 7168
      %v369 = vsel %vm368, %v365, %v367
      %v372 = vsel %vm368, 0.0, %v365
      %v373 = vmul.f32 %v372, %v325
      %v374 = vmul.f32 %v369, %v329
      %375 = vrot.lane.b32.xlu0 %v306, 127
      %v376 = vpop.permute.xlu0 %375
      %377 = vrot.lane.b32.xlu0 %v311, 127
      %v378 = vpop.permute.xlu0 %377
      %vm379 = vcmask 1039360
      %v380 = vsel %vm379, %v376, %v378
      %v383 = vsel %vm379, %v378, 0.0
      %v384 = vmul.f32 %v380, %v355
      %v385 = vmul.f32 %v383, %v359
      %386 = vrot.lane.b32.xlu0 %v306, 113
      %v387 = vpop.permute.xlu0 %386
      %388 = vrot.lane.b32.xlu0 %v311, 113
      %v389 = vpop.permute.xlu0 %388
      %vm390 = vcmask 924672
      %v391 = vsel %vm390, %v387, %v389
      %v394 = vsel %vm390, %v389, 0.0
      %v395 = vmul.f32 %v391, %v325
      %v396 = vmul.f32 %v394, %v329
      %397 = vrot.lane.b32.xlu0 %v306, 112
      %v398 = vpop.permute.xlu0 %397
      %399 = vrot.lane.b32.xlu0 %v311, 112
      %v400 = vpop.permute.xlu0 %399
      %vm401 = vcmask 916480
      %v402 = vsel %vm401, %v398, %v400
      %v404 = vsel %vm401, %v400, 0.0
      %405 = vrot.lane.b32.xlu0 %v306, 111
      %v406 = vpop.permute.xlu0 %405
      %407 = vrot.lane.b32.xlu0 %v311, 111
      %v408 = vpop.permute.xlu0 %407
      %vm409 = vcmask 908288
      %v410 = vsel %vm409, %v406, %v408
      %v413 = vsel %vm409, %v408, 0.0
      %v414 = vmul.f32 %v410, %v355
      %v415 = vmul.f32 %v413, %v359
      %v417 = vrot.slane %v341, 4
      %v418 = vrot.slane %v339, 4
      %v423 = vrot.slane %v373, 4
      %v424 = vrot.slane %v374, 4
      %v430 = vrot.slane %v384, 4
      %v431 = vrot.slane %v385, 4
      %v435 = vrot.slane %v402, 4
      %v436 = vrot.slane %v404, 4
      %vm439 = vcmask 1043456
      %v440 = vsel %vm439, %v332, %v417
      %v441 = vsel %vm439, %v333, %v418
      %v442 = vsel %vm439, %v362, %v423
      %v443 = vsel %vm439, %v363, %v424
      %v444 = vsel %vm439, %v306, %v430
      %v445 = vsel %vm439, %v311, %v431
      %v446 = vsel %vm439, %v395, %v435
      %v447 = vsel %vm439, %v396, %v436
      %v448 = vld [vmem:[%s2] sm:$0xff]
      %v449 = vld [vmem:[%s2 + $0x8] sm:$0xff]
      %v450 = vld [vmem:[%s3] sm:$0xff]
      %v451 = vld [vmem:[%s3 + $0x8] sm:$0xff]
      %453 = vset.pattern.permute.xlu0 0
      %454 = vperm.xlu0 %453, %v450
      %v455 = vpop.permute.xlu0 %454
      %458 = vset.pattern.permute.xlu0 0
      %459 = vperm.xlu0 %458, %v451
      %v460 = vpop.permute.xlu0 %459
      %vm462 = vcmask 293888
      %v464 = vsel %vm462, %v448, 0
      %v467 = vsel %vm462, %v449, 0
      %v470 = vsel %vm439, %v414, 0
      %v473 = vsel %vm439, %v415, 0
      %475 = vmatprep.subr.mxu0 %v441
      %476 = vmatpush1.msra.mxu0 %v440
      %477 = vmatprep.subr.mxu0 %v443
      %478 = vmatpush1.msra.mxu0 %v442
      %479 = vmatprep.subr.mxu0 %v445
      %480 = vmatpush1.msra.mxu0 %v444
      %481 = vmatprep.subr.mxu0 %v447
      %482 = vmatpush1.msra.mxu0 %v446
      %483 = vmatprep.subr.mxu0 %v473
      %484 = vmatpush1.msra.mxu0 %v470
      %485 = vmatprep.subr.mxu0 0.0
      %486 = vmatpush1.msra.mxu0 0.0
      %487 = vmatprep.subr.mxu0 0.0
      %488 = vmatpush1.msra.mxu0 0.0
      %489 = vmatprep.subr.mxu0 0.0
      %490 = vmatpush1.msra.mxu0 0.0
      %491 = vmatprep.subr.mxu0 0.0
      %492 = vmatpush1.msra.mxu0 0.0
      %493 = vmatprep.subr.mxu0 0.0
      %494 = vmatpush1.msra.mxu0 0.0
      %495 = vmatprep.subr.mxu0 0.0
      %496 = vmatpush1.msra.mxu0 0.0
      %497 = vmatprep.subr.mxu0 0.0
      %498 = vmatpush1.msra.mxu0 0.0
      %499 = vmatprep.subr.mxu0 0.0
      %500 = vmatpush1.msra.mxu0 0.0
      %501 = vmatprep.subr.mxu0 0.0
      %502 = vmatpush1.msra.mxu0 0.0
      %503 = vmatprep.subr.mxu0 0.0
      %504 = vmatpush1.msra.mxu0 0.0
      %505 = vmatprep.subr.mxu0 0.0
      %506 = vmatpush1.msra.mxu0 0.0
      %507 = vmatprep.subr.mxu0 0.0
      %508 = vmatpush1.msra.mxu0 0.0
      %509 = vmatprep.subr.mxu0 0.0
      %510 = vmatpush1.msra.mxu0 0.0
      %511 = vmatprep.subr.mxu0 0.0
      %512 = vmatpush1.msra.mxu0 0.0
      %513 = vmatprep.subr.mxu0 0.0
      %514 = vmatpush1.msra.mxu0 0.0
      %515 = vmatprep.subr.mxu0 0.0
      %516 = vmatpush1.msra.mxu0 0.0
      %517 = vmatprep.subr.mxu0 0.0
      %518 = vmatpush1.msra.mxu0 0.0
      %519 = vmatprep.subr.mxu0 0.0
      %520 = vmatpush1.msra.mxu0 0.0
      %521 = vmatprep.subr.mxu0 0.0
      %522 = vmatpush1.msra.mxu0 0.0
      %523 = vmatprep.subr.mxu0 0.0
      %524 = vmatpush1.msra.mxu0 0.0
      %525 = vmatprep.subr.mxu0 0.0
      %526 = vmatpush1.msra.mxu0 0.0
      %527 = vmatprep.subr.mxu0 0.0
      %528 = vmatpush1.msra.mxu0 0.0
      %529 = vmatprep.subr.mxu0 0.0
      %530 = vmatpush1.msra.mxu0 0.0
      %531 = vmatprep.subr.mxu0 0.0
      %532 = vmatpush1.msra.mxu0 0.0
      %533 = vmatprep.subr.mxu0 0.0
      %534 = vmatpush1.msra.mxu0 0.0
      %535 = vmatprep.subr.mxu0 0.0
      %536 = vmatpush1.msra.mxu0 0.0
      %537 = vmatprep.subr.mxu0 0.0
      %538 = vmatpush1.msra.mxu0 0.0
      %539 = vmatprep.mubr.f32.mxu0 0.0
      %540 = vmatmul.mubr.f32.gmra.mrb[0].mxu0 %v464
      %v541 = vpop.f32.mrb[0].mxu0
      %v542 = vadd.f32 %v455, %v541
      %v543 = vpop.f32.mrb[0].mxu0
      %v544 = vadd.f32 %v455, %v543
      %545 = vmatprep.mubr.f32.mxu0 0.0
      %546 = vmatmul.mubr.f32.gmra.mrb[0].mxu0 %v467
      %v547 = vpop.f32.mrb[0].mxu0
      %v548 = vadd.f32 %v460, %v547
      %v549 = vpop.f32.mrb[0].mxu0
      %v550 = vadd.f32 %v460, %v549
      %551 = vdwg.mxu0
      %v552 = vmax.f32 %v542, 0.0
      %v553 = vmax.f32 %v544, 0.0
      %v554 = vmax.f32 %v548, 0.0
      %v555 = vmax.f32 %v550, 0.0
      %560 = vrot.lane.b32.xlu0 %v552, 17
      %v561 = vpop.permute.xlu0 %560
      %562 = vrot.lane.b32.xlu0 %v553, 17
      %v563 = vpop.permute.xlu0 %562
      %564 = vrot.lane.b32.xlu0 %v554, 17
      %v565 = vpop.permute.xlu0 %564
      %566 = vrot.lane.b32.xlu0 %v555, 17
      %v567 = vpop.permute.xlu0 %566
      %v568 = vsel %vm316, %v561, %v563
      %v569 = vsel %vm316, %v565, %v567
      %v574 = vsel %vm316, 0.0, %v561
      %v575 = vsel %vm316, 0.0, %v565
      %v576 = vmul.f32 %v574, %v325
      %v577 = vmul.f32 %v568, %v329
      %v578 = vmul.f32 %v575, %v325
      %v579 = vmul.f32 %v569, %v329
      %580 = vrot.lane.b32.xlu0 %v552, 16
      %v581 = vpop.permute.xlu0 %580
      %582 = vrot.lane.b32.xlu0 %v553, 16
      %v583 = vpop.permute.xlu0 %582
      %584 = vrot.lane.b32.xlu0 %v554, 16
      %v585 = vpop.permute.xlu0 %584
      %586 = vrot.lane.b32.xlu0 %v555, 16
      %v587 = vpop.permute.xlu0 %586
      %v588 = vsel %vm338, %v581, %v583
      %v589 = vsel %vm338, %v585, %v587
      %v594 = vsel %vm338, 0.0, %v581
      %v595 = vsel %vm338, 0.0, %v585
      %596 = vrot.lane.b32.xlu0 %v552, 15
      %v597 = vpop.permute.xlu0 %596
      %598 = vrot.lane.b32.xlu0 %v553, 15
      %v599 = vpop.permute.xlu0 %598
      %600 = vrot.lane.b32.xlu0 %v554, 15
      %v601 = vpop.permute.xlu0 %600
      %602 = vrot.lane.b32.xlu0 %v555, 15
      %v603 = vpop.permute.xlu0 %602
      %v604 = vsel %vm346, %v597, %v599
      %v605 = vsel %vm346, %v601, %v603
      %v610 = vsel %vm346, 0.0, %v597
      %v611 = vsel %vm346, 0.0, %v601
      %v612 = vmul.f32 %v610, %v355
      %v613 = vmul.f32 %v604, %v359
      %v614 = vmul.f32 %v611, %v355
      %v615 = vmul.f32 %v605, %v359
      %616 = vrot.lane.b32.xlu0 %v552, 1
      %v617 = vpop.permute.xlu0 %616
      %618 = vrot.lane.b32.xlu0 %v553, 1
      %v619 = vpop.permute.xlu0 %618
      %620 = vrot.lane.b32.xlu0 %v554, 1
      %v621 = vpop.permute.xlu0 %620
      %622 = vrot.lane.b32.xlu0 %v555, 1
      %v623 = vpop.permute.xlu0 %622
      %v624 = vsel %vm368, %v617, %v619
      %v625 = vsel %vm368, %v621, %v623
      %v630 = vsel %vm368, 0.0, %v617
      %v631 = vsel %vm368, 0.0, %v621
      %v632 = vmul.f32 %v630, %v325
      %v633 = vmul.f32 %v624, %v329
      %v634 = vmul.f32 %v631, %v325
      %v635 = vmul.f32 %v625, %v329
      %636 = vrot.lane.b32.xlu0 %v552, 127
      %v637 = vpop.permute.xlu0 %636
      %638 = vrot.lane.b32.xlu0 %v553, 127
      %v639 = vpop.permute.xlu0 %638
      %640 = vrot.lane.b32.xlu0 %v554, 127
      %v641 = vpop.permute.xlu0 %640
      %642 = vrot.lane.b32.xlu0 %v555, 127
      %v643 = vpop.permute.xlu0 %642
      %v644 = vsel %vm379, %v637, %v639
      %v645 = vsel %vm379, %v641, %v643
      %v650 = vsel %vm379, %v639, 0.0
      %v651 = vsel %vm379, %v643, 0.0
      %v652 = vmul.f32 %v644, %v355
      %v653 = vmul.f32 %v650, %v359
      %v654 = vmul.f32 %v645, %v355
      %v655 = vmul.f32 %v651, %v359
      %656 = vrot.lane.b32.xlu0 %v552, 113
      %v657 = vpop.permute.xlu0 %656
      %658 = vrot.lane.b32.xlu0 %v553, 113
      %v659 = vpop.permute.xlu0 %658
      %660 = vrot.lane.b32.xlu0 %v554, 113
      %v661 = vpop.permute.xlu0 %660
      %662 = vrot.lane.b32.xlu0 %v555, 113
      %v663 = vpop.permute.xlu0 %662
      %v664 = vsel %vm390, %v657, %v659
      %v665 = vsel %vm390, %v661, %v663
      %v670 = vsel %vm390, %v659, 0.0
      %v671 = vsel %vm390, %v663, 0.0
      %v672 = vmul.f32 %v664, %v325
      %v673 = vmul.f32 %v670, %v329
      %v674 = vmul.f32 %v665, %v325
      %v675 = vmul.f32 %v671, %v329
      %676 = vrot.lane.b32.xlu0 %v552, 112
      %v677 = vpop.permute.xlu0 %676
      %678 = vrot.lane.b32.xlu0 %v553, 112
      %v679 = vpop.permute.xlu0 %678
      %680 = vrot.lane.b32.xlu0 %v554, 112
      %v681 = vpop.permute.xlu0 %680
      %682 = vrot.lane.b32.xlu0 %v555, 112
      %v683 = vpop.permute.xlu0 %682
      %v684 = vsel %vm401, %v677, %v679
      %v685 = vsel %vm401, %v681, %v683
      %v690 = vsel %vm401, %v679, 0.0
      %v691 = vsel %vm401, %v683, 0.0
      %692 = vrot.lane.b32.xlu0 %v552, 111
      %v693 = vpop.permute.xlu0 %692
      %694 = vrot.lane.b32.xlu0 %v553, 111
      %v695 = vpop.permute.xlu0 %694
      %696 = vrot.lane.b32.xlu0 %v554, 111
      %v697 = vpop.permute.xlu0 %696
      %698 = vrot.lane.b32.xlu0 %v555, 111
      %v699 = vpop.permute.xlu0 %698
      %v700 = vsel %vm409, %v693, %v695
      %v701 = vsel %vm409, %v697, %v699
      %v706 = vsel %vm409, %v695, 0.0
      %v707 = vsel %vm409, %v699, 0.0
      %v708 = vmul.f32 %v700, %v355
      %v709 = vmul.f32 %v706, %v359
      %v710 = vmul.f32 %v701, %v355
      %v711 = vmul.f32 %v707, %v359
      %v712 = vld [vmem:[%s4] sm:$0xff]
      %v713 = vld [vmem:[%s4 + $0x8] sm:$0xff]
      %v714 = vld [vmem:[%s4 + $0x10] sm:$0xff]
      %v715 = vld [vmem:[%s4 + $0x18] sm:$0xff]
      %v716 = vld [vmem:[%s5] sm:$0xff]
      %v717 = vld [vmem:[%s5 + $0x8] sm:$0xff]
      %719 = vset.pattern.permute.xlu0 0
      %720 = vperm.xlu0 %719, %v716
      %v721 = vpop.permute.xlu0 %720
      %724 = vset.pattern.permute.xlu0 0
      %725 = vperm.xlu0 %724, %v717
      %v726 = vpop.permute.xlu0 %725
      %v729 = vsel %vm338, %v713, 0
      %v732 = vsel %vm338, %v715, 0
      %734 = vmatprep.subr.mxu0 %v577
      %735 = vmatpush1.msra.mxu0 %v576
      %736 = vmatprep.subr.mxu0 %v579
      %737 = vmatpush1.msra.mxu0 %v578
      %738 = vmatprep.subr.mxu0 %v588
      %739 = vmatpush1.msra.mxu0 %v594
      %740 = vmatprep.subr.mxu0 %v589
      %741 = vmatpush1.msra.mxu0 %v595
      %742 = vmatprep.subr.mxu0 %v613
      %743 = vmatpush1.msra.mxu0 %v612
      %744 = vmatprep.subr.mxu0 %v615
      %745 = vmatpush1.msra.mxu0 %v614
      %746 = vmatprep.subr.mxu0 %v633
      %747 = vmatpush1.msra.mxu0 %v632
      %748 = vmatprep.subr.mxu0 %v635
      %749 = vmatpush1.msra.mxu0 %v634
      %750 = vmatprep.subr.mxu0 %v553
      %751 = vmatpush1.msra.mxu0 %v552
      %752 = vmatprep.subr.mxu0 %v555
      %753 = vmatpush1.msra.mxu0 %v554
      %754 = vmatprep.subr.mxu0 %v653
      %755 = vmatpush1.msra.mxu0 %v652
      %756 = vmatprep.subr.mxu0 %v655
      %757 = vmatpush1.msra.mxu0 %v654
      %758 = vmatprep.subr.mxu0 %v673
      %759 = vmatpush1.msra.mxu0 %v672
      %760 = vmatprep.subr.mxu0 %v675
      %761 = vmatpush1.msra.mxu0 %v674
      %762 = vmatprep.subr.mxu0 %v690
      %763 = vmatpush1.msra.mxu0 %v684
      %764 = vmatprep.subr.mxu0 %v691
      %765 = vmatpush1.msra.mxu0 %v685
      %766 = vmatprep.subr.mxu0 %v709
      %767 = vmatpush1.msra.mxu0 %v708
      %768 = vmatprep.subr.mxu0 %v711
      %769 = vmatpush1.msra.mxu0 %v710
      %770 = vmatprep.subr.mxu0 0.0
      %771 = vmatpush1.msra.mxu0 0.0
      %772 = vmatprep.subr.mxu0 0.0
      %773 = vmatpush1.msra.mxu0 0.0
      %774 = vmatprep.subr.mxu0 0.0
      %775 = vmatpush1.msra.mxu0 0.0
      %776 = vmatprep.subr.mxu0 0.0
      %777 = vmatpush1.msra.mxu0 0.0
      %778 = vmatprep.subr.mxu0 0.0
      %779 = vmatpush1.msra.mxu0 0.0
      %780 = vmatprep.subr.mxu0 0.0
      %781 = vmatpush1.msra.mxu0 0.0
      %782 = vmatprep.subr.mxu0 0.0
      %783 = vmatpush1.msra.mxu0 0.0
      %784 = vmatprep.subr.mxu0 0.0
      %785 = vmatpush1.msra.mxu0 0.0
      %786 = vmatprep.subr.mxu0 0.0
      %787 = vmatpush1.msra.mxu0 0.0
      %788 = vmatprep.subr.mxu0 0.0
      %789 = vmatpush1.msra.mxu0 0.0
      %790 = vmatprep.subr.mxu0 0.0
      %791 = vmatpush1.msra.mxu0 0.0
      %792 = vmatprep.subr.mxu0 0.0
      %793 = vmatpush1.msra.mxu0 0.0
      %794 = vmatprep.subr.mxu0 0.0
      %795 = vmatpush1.msra.mxu0 0.0
      %796 = vmatprep.subr.mxu0 0.0
      %797 = vmatpush1.msra.mxu0 0.0
      %798 = vmatprep.mubr.f32.mxu0 %v729
      %799 = vmatmul.mubr.f32.gmra.mrb[0].mxu0 %v712
      %v800 = vpop.f32.mrb[0].mxu0
      %v801 = vadd.f32 %v721, %v800
      %v802 = vpop.f32.mrb[0].mxu0
      %v803 = vadd.f32 %v721, %v802
      %804 = vmatprep.mubr.f32.mxu0 %v732
      %805 = vmatmul.mubr.f32.gmra.mrb[0].mxu0 %v714
      %v806 = vpop.f32.mrb[0].mxu0
      %v807 = vadd.f32 %v726, %v806
      %v808 = vpop.f32.mrb[0].mxu0
      %v809 = vadd.f32 %v726, %v808
      %810 = vdwg.mxu0
      %v811 = vld [vmem:[%s6] sm:$0xff]
      %v812 = vld [vmem:[%s6 + $0x8] sm:$0xff]
      %v813 = vld [vmem:[%s7] sm:$0xff]
      %v814 = vld [vmem:[%s7 + $0x8] sm:$0xff]
      %816 = vset.pattern.permute.xlu0 0
      %817 = vperm.xlu0 %816, %v813
      %v818 = vpop.permute.xlu0 %817
      %821 = vset.pattern.permute.xlu0 0
      %822 = vperm.xlu0 %821, %v814
      %v823 = vpop.permute.xlu0 %822
      %vm825 = vcmask 31744
      %v827 = vsel %vm825, %v811, 0
      %v830 = vsel %vm825, %v812, 0
      %v832 = vsel %vm439, %v306, 0
      %v834 = vsel %vm439, %v311, 0
      %836 = vmatprep.subr.mxu0 %v834
      %837 = vmatpush1.msra.mxu0 %v832
      %838 = vmatprep.subr.mxu0 0.0
      %839 = vmatpush1.msra.mxu0 0.0
      %840 = vmatprep.subr.mxu0 0.0
      %841 = vmatpush1.msra.mxu0 0.0
      %842 = vmatprep.subr.mxu0 0.0
      %843 = vmatpush1.msra.mxu0 0.0
      %844 = vmatprep.subr.mxu0 0.0
      %845 = vmatpush1.msra.mxu0 0.0
      %846 = vmatprep.subr.mxu0 0.0
      %847 = vmatpush1.msra.mxu0 0.0
      %848 = vmatprep.subr.mxu0 0.0
      %849 = vmatpush1.msra.mxu0 0.0
      %850 = vmatprep.subr.mxu0 0.0
      %851 = vmatpush1.msra.mxu0 0.0
      %852 = vmatprep.subr.mxu0 0.0
      %853 = vmatpush1.msra.mxu0 0.0
      %854 = vmatprep.subr.mxu0 0.0
      %855 = vmatpush1.msra.mxu0 0.0
      %856 = vmatprep.subr.mxu0 0.0
      %857 = vmatpush1.msra.mxu0 0.0
      %858 = vmatprep.subr.mxu0 0.0
      %859 = vmatpush1.msra.mxu0 0.0
      %860 = vmatprep.subr.mxu0 0.0
      %861 = vmatpush1.msra.mxu0 0.0
      %862 = vmatprep.subr.mxu0 0.0
      %863 = vmatpush1.msra.mxu0 0.0
      %864 = vmatprep.subr.mxu0 0.0
      %865 = vmatpush1.msra.mxu0 0.0
      %866 = vmatprep.subr.mxu0 0.0
      %867 = vmatpush1.msra.mxu0 0.0
      %868 = vmatprep.subr.mxu0 0.0
      %869 = vmatpush1.msra.mxu0 0.0
      %870 = vmatprep.subr.mxu0 0.0
      %871 = vmatpush1.msra.mxu0 0.0
      %872 = vmatprep.subr.mxu0 0.0
      %873 = vmatpush1.msra.mxu0 0.0
      %874 = vmatprep.subr.mxu0 0.0
      %875 = vmatpush1.msra.mxu0 0.0
      %876 = vmatprep.subr.mxu0 0.0
      %877 = vmatpush1.msra.mxu0 0.0
      %878 = vmatprep.subr.mxu0 0.0
      %879 = vmatpush1.msra.mxu0 0.0
      %880 = vmatprep.subr.mxu0 0.0
      %881 = vmatpush1.msra.mxu0 0.0
      %882 = vmatprep.subr.mxu0 0.0
      %883 = vmatpush1.msra.mxu0 0.0
      %884 = vmatprep.subr.mxu0 0.0
      %885 = vmatpush1.msra.mxu0 0.0
      %886 = vmatprep.subr.mxu0 0.0
      %887 = vmatpush1.msra.mxu0 0.0
      %888 = vmatprep.subr.mxu0 0.0
      %889 = vmatpush1.msra.mxu0 0.0
      %890 = vmatprep.subr.mxu0 0.0
      %891 = vmatpush1.msra.mxu0 0.0
      %892 = vmatprep.subr.mxu0 0.0
      %893 = vmatpush1.msra.mxu0 0.0
      %894 = vmatprep.subr.mxu0 0.0
      %895 = vmatpush1.msra.mxu0 0.0
      %896 = vmatprep.subr.mxu0 0.0
      %897 = vmatpush1.msra.mxu0 0.0
      %898 = vmatprep.subr.mxu0 0.0
      %899 = vmatpush1.msra.mxu0 0.0
      %900 = vmatprep.mubr.f32.mxu0 0.0
      %901 = vmatmul.mubr.f32.gmra.mrb[0].mxu0 %v827
      %v902 = vpop.f32.mrb[0].mxu0
      %v903 = vadd.f32 %v818, %v902
      %v904 = vpop.f32.mrb[0].mxu0
      %v905 = vadd.f32 %v818, %v904
      %906 = vmatprep.mubr.f32.mxu0 0.0
      %907 = vmatmul.mubr.f32.gmra.mrb[0].mxu0 %v830
      %v908 = vpop.f32.mrb[0].mxu0
      %v909 = vadd.f32 %v823, %v908
      %v910 = vpop.f32.mrb[0].mxu0
      %v911 = vadd.f32 %v823, %v910
      %912 = vdwg.mxu0
      %v913 = vadd.f32 %v801, %v903
      %v914 = vadd.f32 %v803, %v905
      %v915 = vadd.f32 %v807, %v909
      %v916 = vadd.f32 %v809, %v911
      %v917 = vmax.f32 %v913, 0.0
      %v918 = vmax.f32 %v914, 0.0
      %v919 = vmax.f32 %v915, 0.0
      %v920 = vmax.f32 %v916, 0.0
      %921 = vst [vmem:[%s305] sm:$0xff] %v917
      %922 = vst [vmem:[%s305 + $0x8] sm:$0xff] %v918
      %923 = vst [vmem:[%s305 + $0x10] sm:$0xff] %v919
      %924 = vst [vmem:[%s305 + $0x18] sm:$0xff] %v920
      %p925 = scmp.lt.s32.totalorder %s19, 1
      %s926 = scalar_select %p925, %s19, 1
      %s927 = smul.addr %s926, 4
      %s928 = smul.addr %s927, 8
      %s929 = scalar_lea.vmem %s8, %s928
      // Predicated region
      $region53: #{block_forward.1} parent=51 // pred_check
        %p930 = pneg %p210
      $region54: #{block_forward.1} parent=51 // pred_check_branch
        %932 = sbr.rel (%p930) target = $region56
      $region55: #{block_forward.1} parent=51 // pred_region
        _
      $region56: #{block_forward.1} parent=51 // pred_fallthru
        _
    $region52: #{block_forward.1} parent=5 // pred_fallthru
      _
    %p933 = scmp.le.s32.totalorder 2, %s14
    // Predicated region
    $region57: #{block_forward.1} parent=5 // pred_check
      %p934 = pneg %p933
    $region58: #{block_forward.1} parent=5 // pred_check_branch
      %936 = sbr.rel (%p934) target = $region60
    $region59: #{block_forward.1} parent=5 // pred_region
      %s937 = ssub.s32 %s14, 2
      // Predicated region
      $region61: #{block_forward.1} parent=59 // pred_check
        %p938 = pneg %p216
      $region62: #{block_forward.1} parent=59 // pred_check_branch
        %940 = sbr.rel (%p938) target = $region64
      $region63: #{block_forward.1} parent=59 // pred_region
        %p941 = scmp.lt.s32.totalorder %s20, 1
        %s942 = scalar_select %p941, %s20, 1
        %s943 = smul.addr %s942, 4
        %s944 = smul.addr %s943, 8
        %s945 = scalar_lea.vmem %s8, %s944
      $region64: #{block_forward.1} parent=59 // pred_fallthru
        _
    $region60: #{block_forward.1} parent=5 // pred_fallthru
      _
  $region6: #{block_forward.1} parent=0 // loop_footer
    %s18 = sadd.s32 1, %s14
  $region7: #{block_forward.1} parent=0 // loop_footer_branch
    %13 = sbr.rel target = $region3
  $region8: #{block_forward.1} parent=0 // loop_exit
    _

</llo_original>
